<compile_context>
chip_gen: v7x
topology: tpu7x:2x2x1
jax: 0.10.0
libtpu: 0.0.40
codegen_flags: <defaults>
</compile_context>

<pallas_src>
import functools

import jax
import jax.numpy as jnp
from jax.experimental import pallas as pl
from jax.experimental.pallas import tpu as pltpu

EPS = 1e-5        # nn.InstanceNorm2d default eps
NEG_SLOPE = 0.1   # nn.LeakyReLU(0.1)


def _fused_kernel(x_ref, w1_ref, w2_ref, o_ref, slab1_ref, slab2_ref, y1p_ref,
                  *, H, W):
    """One batch sample, channel-major ("lane-dense") layout.

    x_ref    : (1, Cin, HW + 2*(W+1))  flattened input, W+1 zero pad each end
    w1_ref   : (Cout, 9*Cin)           conv1 weights, taps stacked along K
    w2_ref   : (Cout, 9*Cout)          conv2 weights, taps stacked along K
    o_ref    : (1, Cout, HW)           output (reshapes straight to NCHW)
    slab1_ref: (9*Cin,  HW)            VMEM scratch: stacked taps for conv1
    slab2_ref: (9*Cout, HW)            VMEM scratch: stacked taps for conv2
    y1p_ref  : (Cout, HW + 2*(W+1))    VMEM scratch: padded conv1+IN activation
    """
    HW = H * W
    P = W + 1                      # flat zero pad (elements) on each end
    cin = slab1_ref.shape[0] // 9
    cout = o_ref.shape[1]
    inv_hw = 1.0 / HW
    cdt = slab1_ref.dtype

    # {0,1} edge masks in the compute dtype (one multiply per masked tap).
    # In the flat layout the dx=0 tap at column 0 (dx=2 at column W-1) would
    # read a pixel from the previous (next) image row — those lanes are zeroed.
    col = jax.lax.broadcasted_iota(jnp.int32, (1, HW), 1) % W
    mask_l = (col != 0).astype(cdt)
    mask_r = (col != (W - 1)).astype(cdt)

    def fill_slab(slab_ref, read_tap, c):
        # Stack the 9 taps along the contraction axis: rows [(dy*3+dx)*c : +c]
        # hold tap (dy, dx) of all c channels — matches the weight layout
        # (Cout, 3, 3, C) reshaped to (Cout, 9*C).
        for dy in range(3):
            for dx in range(3):
                tap = read_tap(dy * W + dx)            # (c, HW) compute dtype
                if dx == 0:
                    tap = tap * mask_l
                elif dx == 2:
                    tap = tap * mask_r
                slab_ref[pl.ds((dy * 3 + dx) * c, c), :] = tap

    def instance_norm(y):
        # Per-channel norm over the lane (pixel) axis, two-pass variance.
        mean = jnp.sum(y, axis=1, keepdims=True) * inv_hw
        yc = y - mean
        var = jnp.sum(yc * yc, axis=1, keepdims=True) * inv_hw
        return yc * jax.lax.rsqrt(var + EPS)

    # ---- Stage 1: conv1 + InstanceNorm (bias cancelled exactly by the IN). --
    fill_slab(slab1_ref, lambda s: x_ref[0, :, pl.ds(s, HW)], cin)
    y1 = instance_norm(jnp.dot(w1_ref[...], slab1_ref[...],
                               preferred_element_type=jnp.float32))

    # Hand y1 to stage 2 entirely in VMEM: zero only the two thin pad strips,
    # overwrite only the middle HW lanes.
    y1p_ref[:, pl.ds(0, P)] = jnp.zeros((cout, P), cdt)
    y1p_ref[:, pl.ds(P + HW, P)] = jnp.zeros((cout, P), cdt)
    y1p_ref[:, pl.ds(P, HW)] = y1.astype(cdt)

    # ---- Stage 2: conv2 + InstanceNorm + LeakyReLU(0.1). -------------------
    fill_slab(slab2_ref, lambda s: y1p_ref[:, pl.ds(s, HW)], cout)
    y2 = instance_norm(jnp.dot(w2_ref[...], slab2_ref[...],
                               preferred_element_type=jnp.float32))
    o_ref[0] = jnp.where(y2 > 0, y2, NEG_SLOPE * y2).astype(o_ref.dtype)


def double_res_conv_forward(x_nchw, params, *, compute_dtype=jnp.bfloat16,
                            out_dtype=None):
    """Matches double_res_conv.forward: IN(conv1(x)) -> IN(conv2(.)) -> LeakyReLU."""
    # Biases are exactly cancelled by InstanceNorm (affine=False, module default).
    w1, _b1, w2, _b2 = params
    N, Cin, H, W = x_nchw.shape
    Cout = w1.shape[0]
    HW = H * W
    P = W + 1
    PFX = HW + 2 * P
    if out_dtype is None:
        out_dtype = compute_dtype

    # Flatten spatial dims and zero-pad W+1 elements at each end: every 3x3 tap
    # becomes the in-bounds constant-offset slice start = dy*W + dx, and the
    # two column-wrapping taps are fixed by a per-lane mask inside the kernel.
    xflat = x_nchw.reshape(N, Cin, HW).astype(compute_dtype)
    xflat = jnp.pad(xflat, ((0, 0), (0, 0), (P, P)))

    # (Cout, Cin, 3, 3) -> (Cout, 9*Cin): taps stacked along the contraction
    # axis so each conv stage is a single MXU matmul.
    w1s = jnp.transpose(w1, (0, 2, 3, 1)).reshape(Cout, 9 * Cin).astype(compute_dtype)
    w2s = jnp.transpose(w2, (0, 2, 3, 1)).reshape(Cout, 9 * Cout).astype(compute_dtype)

    kernel = functools.partial(_fused_kernel, H=H, W=W)
    out = pl.pallas_call(
        kernel,
        out_shape=jax.ShapeDtypeStruct((N, Cout, HW), out_dtype),
        grid_spec=pltpu.PrefetchScalarGridSpec(
            num_scalar_prefetch=0,
            grid=(N,),
            in_specs=[
                pl.BlockSpec((1, Cin, PFX), lambda n: (n, 0, 0)),
                # Constant index maps -> stacked weights stay resident in VMEM.
                pl.BlockSpec((Cout, 9 * Cin), lambda n: (0, 0)),
                pl.BlockSpec((Cout, 9 * Cout), lambda n: (0, 0)),
            ],
            out_specs=pl.BlockSpec((1, Cout, HW), lambda n: (n, 0, 0)),
            scratch_shapes=[
                pltpu.VMEM((9 * Cin, HW), compute_dtype),   # conv1 tap slab
                pltpu.VMEM((9 * Cout, HW), compute_dtype),  # conv2 tap slab
                pltpu.VMEM((Cout, PFX), compute_dtype),     # padded y1
            ],
        ),
        compiler_params=pltpu.CompilerParams(
            dimension_semantics=("parallel",),
            vmem_limit_bytes=32 * 1024 * 1024,
        ),
    )(xflat, w1s, w2s)

    # (N, Cout, H*W) is already channel-major: reshape straight to NCHW.
    return out.reshape(N, Cout, H, W)


# ------------------------------ reference check -------------------------------

def ref_forward(x, params):
    w1, b1, w2, b2 = params

    def conv(x, w, b):
        y = jax.lax.conv_general_dilated(
            x, w, (1, 1), ((1, 1), (1, 1)),
            dimension_numbers=("NCHW", "OIHW", "NCHW"),
            precision=jax.lax.Precision.HIGHEST)
        return y + b[None, :, None, None]

    def inorm(y):
        m = jnp.mean(y, axis=(2, 3), keepdims=True)
        v = jnp.mean((y - m) ** 2, axis=(2, 3), keepdims=True)
        return (y - m) * jax.lax.rsqrt(v + EPS)

    y = inorm(conv(x, w1, b1))
    y = inorm(conv(y, w2, b2))
    return jnp.where(y > 0, y, NEG_SLOPE * y)


if __name__ == "__main__":
    N, Cin, Cout, H, W = 2, 4, 8, 16, 16

    key = jax.random.PRNGKey(0)
    kx, k1, k2, k3, k4 = jax.random.split(key, 5)

    x = jax.random.normal(kx, (N, Cin, H, W), jnp.float32)

    # Conv2d-shaped synthetic parameters (biases included in the reference; the
    # kernel drops them because InstanceNorm cancels them exactly).
    bound1 = 1.0 / (Cin * 9) ** 0.5
    w1 = jax.random.uniform(k1, (Cout, Cin, 3, 3), jnp.float32, -bound1, bound1)
    b1 = jax.random.uniform(k2, (Cout,), jnp.float32, -bound1, bound1)
    bound2 = 1.0 / (Cout * 9) ** 0.5
    w2 = jax.random.uniform(k3, (Cout, Cout, 3, 3), jnp.float32, -bound2, bound2)
    b2 = jax.random.uniform(k4, (Cout,), jnp.float32, -bound2, bound2)
    params = (w1, b1, w2, b2)

    ref = jax.block_until_ready(ref_forward(x, params))

    # 1) Exact-math check: f32 compute + f32 output must match the
    #    PyTorch-equivalent reference tightly (proves the fused math).
    out_f32 = jax.block_until_ready(
        double_res_conv_forward(x, params, compute_dtype=jnp.float32,
                                out_dtype=jnp.float32))
    assert out_f32.shape == (N, Cout, H, W), out_f32.shape
    err_f32 = float(jnp.max(jnp.abs(out_f32 - ref)))
    assert jnp.allclose(out_f32, ref, atol=2e-3, rtol=2e-3), err_f32

    # 2) Fast path: bf16 activations/weights/output (f32 accumulation and
    #    statistics).  bf16 input + y1 + output quantization dominates the
    #    deviation on the unit-variance IN output, hence the looser tolerance.
    out_bf16 = jax.block_until_ready(
        double_res_conv_forward(x, params, compute_dtype=jnp.bfloat16))
    assert out_bf16.shape == (N, Cout, H, W), out_bf16.shape
    err_bf16 = float(jnp.max(jnp.abs(out_bf16.astype(jnp.float32) - ref)))
    assert jnp.allclose(out_bf16.astype(jnp.float32), ref,
                        atol=5e-2, rtol=5e-2), err_bf16

    print("KERNEL_OK")
</pallas_src>

<mosaic_0001>
module attributes {stable_mosaic.version = 11 : i64} {
  func.func @_fused_kernel(%arg0: i32, %arg1: memref<1x4x290xf32, #tpu.memory_space<vmem>>, %arg2: memref<8x36xf32, #tpu.memory_space<vmem>>, %arg3: memref<8x72xf32, #tpu.memory_space<vmem>>, %arg4: memref<1x8x256xf32, #tpu.memory_space<vmem>>, %arg5: memref<36x256xf32, #tpu.memory_space<vmem>>, %arg6: memref<72x256xf32, #tpu.memory_space<vmem>>, %arg7: memref<8x290xf32, #tpu.memory_space<vmem>>) attributes {dimension_semantics = [#tpu.dimension_semantics<parallel>], iteration_bounds = array<i64: 2>, scalar_prefetch = 0 : i64, scratch_operands = 3 : i64, tpu.core_type = #tpu.core_type<tc>, window_params = [{transform_indices = @transform_0, window_bounds = array<i64: 1, 4, 290>}, {pipeline_mode = #tpu.pipeline_mode<synchronous>, transform_indices = @transform_1, window_bounds = array<i64: 8, 36>}, {pipeline_mode = #tpu.pipeline_mode<synchronous>, transform_indices = @transform_2, window_bounds = array<i64: 8, 72>}, {transform_indices = @transform_3, window_bounds = array<i64: 1, 8, 256>}]} {
    %0 = tpu.iota {dimensions = array<i32: 1>} : vector<1x256xi32>
    %c16_i32 = arith.constant 16 : i32
    %c0_i32 = arith.constant 0 : i32
    %1 = arith.cmpi eq, %c16_i32, %c0_i32 : i32
    %c1_i32 = arith.constant 1 : i32
    %2 = arith.select %1, %c1_i32, %c16_i32 : i32
    %3 = vector.broadcast %2 : i32 to vector<1x256xi32>
    %4 = arith.remsi %0, %3 : vector<1x256xi32>
    %c0_i32_0 = arith.constant 0 : i32
    %5 = vector.broadcast %c0_i32_0 : i32 to vector<1x256xi32>
    %6 = arith.cmpi ne, %4, %5 : vector<1x256xi32>
    %c0_i32_1 = arith.constant 0 : i32
    %7 = vector.broadcast %c0_i32_1 : i32 to vector<1x256xi32>
    %8 = arith.cmpi slt, %4, %7 : vector<1x256xi32>
    %c0_i32_2 = arith.constant 0 : i32
    %9 = arith.cmpi slt, %2, %c0_i32_2 : i32
    %10 = vector.broadcast %9 : i1 to vector<1x256xi1>
    %11 = vector.broadcast %10 : vector<1x256xi1> to vector<1x256xi1>
    %12 = arith.xori %8, %11 : vector<1x256xi1>
    %13 = arith.andi %12, %6 : vector<1x256xi1>
    %14 = vector.broadcast %2 : i32 to vector<1x256xi32>
    %15 = arith.addi %4, %14 : vector<1x256xi32>
    %16 = arith.select %13, %15, %4 : vector<1x256xi1>, vector<1x256xi32>
    %c0_i32_3 = arith.constant 0 : i32
    %17 = vector.broadcast %c0_i32_3 : i32 to vector<1x256xi32>
    %18 = arith.cmpi ne, %16, %17 : vector<1x256xi32>
    %19 = arith.extui %18 : vector<1x256xi1> to vector<1x256xi32>
    %20 = arith.sitofp %19 : vector<1x256xi32> to vector<1x256xf32>
    %c15_i32 = arith.constant 15 : i32
    %21 = vector.broadcast %c15_i32 : i32 to vector<1x256xi32>
    %22 = arith.cmpi ne, %16, %21 : vector<1x256xi32>
    %23 = arith.extui %22 : vector<1x256xi1> to vector<1x256xi32>
    %24 = arith.sitofp %23 : vector<1x256xi32> to vector<1x256xf32>
    %c0 = arith.constant 0 : index
    %c0_4 = arith.constant 0 : index
    %c0_5 = arith.constant 0 : index
    %25 = vector.load %arg1[%c0, %c0_4, %c0_5] : memref<1x4x290xf32, #tpu.memory_space<vmem>>, vector<1x4x256xf32>
    %26 = vector.shape_cast %25 : vector<1x4x256xf32> to vector<4x256xf32>
    %27 = vector.broadcast %20 : vector<1x256xf32> to vector<4x256xf32>
    %28 = arith.mulf %26, %27 : vector<4x256xf32>
    %c0_6 = arith.constant 0 : index
    %c0_7 = arith.constant 0 : index
    %29 = vector.load %arg5[%c0_6, %c0_7] : memref<36x256xf32, #tpu.memory_space<vmem>>, vector<4x256xf32>
    tpu.vector_store %arg5[%c0_6, %c0_7], %28 {strides = array<i32>} : memref<36x256xf32, #tpu.memory_space<vmem>>, vector<4x256xf32>,
    %c0_8 = arith.constant 0 : index
    %c0_9 = arith.constant 0 : index
    %c1 = arith.constant 1 : index
    %30 = vector.load %arg1[%c0_8, %c0_9, %c1] : memref<1x4x290xf32, #tpu.memory_space<vmem>>, vector<1x4x256xf32>
    %31 = vector.shape_cast %30 : vector<1x4x256xf32> to vector<4x256xf32>
    %c4 = arith.constant 4 : index
    %c0_10 = arith.constant 0 : index
    %32 = vector.load %arg5[%c4, %c0_10] : memref<36x256xf32, #tpu.memory_space<vmem>>, vector<4x256xf32>
    tpu.vector_store %arg5[%c4, %c0_10], %31 {strides = array<i32>} : memref<36x256xf32, #tpu.memory_space<vmem>>, vector<4x256xf32>,
    %c0_11 = arith.constant 0 : index
    %c0_12 = arith.constant 0 : index
    %c2 = arith.constant 2 : index
    %33 = vector.load %arg1[%c0_11, %c0_12, %c2] : memref<1x4x290xf32, #tpu.memory_space<vmem>>, vector<1x4x256xf32>
    %34 = vector.shape_cast %33 : vector<1x4x256xf32> to vector<4x256xf32>
    %35 = vector.broadcast %24 : vector<1x256xf32> to vector<4x256xf32>
    %36 = arith.mulf %34, %35 : vector<4x256xf32>
    %c8 = arith.constant 8 : index
    %c0_13 = arith.constant 0 : index
    %37 = vector.load %arg5[%c8, %c0_13] : memref<36x256xf32, #tpu.memory_space<vmem>>, vector<4x256xf32>
    tpu.vector_store %arg5[%c8, %c0_13], %36 {strides = array<i32>} : memref<36x256xf32, #tpu.memory_space<vmem>>, vector<4x256xf32>,
    %c0_14 = arith.constant 0 : index
    %c0_15 = arith.constant 0 : index
    %c16 = arith.constant 16 : index
    %38 = vector.load %arg1[%c0_14, %c0_15, %c16] : memref<1x4x290xf32, #tpu.memory_space<vmem>>, vector<1x4x256xf32>
    %39 = vector.shape_cast %38 : vector<1x4x256xf32> to vector<4x256xf32>
    %40 = vector.broadcast %20 : vector<1x256xf32> to vector<4x256xf32>
    %41 = arith.mulf %39, %40 : vector<4x256xf32>
    %c12 = arith.constant 12 : index
    %c0_16 = arith.constant 0 : index
    %42 = vector.load %arg5[%c12, %c0_16] : memref<36x256xf32, #tpu.memory_space<vmem>>, vector<4x256xf32>
    tpu.vector_store %arg5[%c12, %c0_16], %41 {strides = array<i32>} : memref<36x256xf32, #tpu.memory_space<vmem>>, vector<4x256xf32>,
    %c0_17 = arith.constant 0 : index
    %c0_18 = arith.constant 0 : index
    %c17 = arith.constant 17 : index
    %43 = vector.load %arg1[%c0_17, %c0_18, %c17] : memref<1x4x290xf32, #tpu.memory_space<vmem>>, vector<1x4x256xf32>
    %44 = vector.shape_cast %43 : vector<1x4x256xf32> to vector<4x256xf32>
    %c16_19 = arith.constant 16 : index
    %c0_20 = arith.constant 0 : index
    %45 = vector.load %arg5[%c16_19, %c0_20] : memref<36x256xf32, #tpu.memory_space<vmem>>, vector<4x256xf32>
    tpu.vector_store %arg5[%c16_19, %c0_20], %44 {strides = array<i32>} : memref<36x256xf32, #tpu.memory_space<vmem>>, vector<4x256xf32>,
    %c0_21 = arith.constant 0 : index
    %c0_22 = arith.constant 0 : index
    %c18 = arith.constant 18 : index
    %46 = vector.load %arg1[%c0_21, %c0_22, %c18] : memref<1x4x290xf32, #tpu.memory_space<vmem>>, vector<1x4x256xf32>
    %47 = vector.shape_cast %46 : vector<1x4x256xf32> to vector<4x256xf32>
    %48 = vector.broadcast %24 : vector<1x256xf32> to vector<4x256xf32>
    %49 = arith.mulf %47, %48 : vector<4x256xf32>
    %c20 = arith.constant 20 : index
    %c0_23 = arith.constant 0 : index
    %50 = vector.load %arg5[%c20, %c0_23] : memref<36x256xf32, #tpu.memory_space<vmem>>, vector<4x256xf32>
    tpu.vector_store %arg5[%c20, %c0_23], %49 {strides = array<i32>} : memref<36x256xf32, #tpu.memory_space<vmem>>, vector<4x256xf32>,
    %c0_24 = arith.constant 0 : index
    %c0_25 = arith.constant 0 : index
    %c32 = arith.constant 32 : index
    %51 = vector.load %arg1[%c0_24, %c0_25, %c32] : memref<1x4x290xf32, #tpu.memory_space<vmem>>, vector<1x4x256xf32>
    %52 = vector.shape_cast %51 : vector<1x4x256xf32> to vector<4x256xf32>
    %53 = vector.broadcast %20 : vector<1x256xf32> to vector<4x256xf32>
    %54 = arith.mulf %52, %53 : vector<4x256xf32>
    %c24 = arith.constant 24 : index
    %c0_26 = arith.constant 0 : index
    %55 = vector.load %arg5[%c24, %c0_26] : memref<36x256xf32, #tpu.memory_space<vmem>>, vector<4x256xf32>
    tpu.vector_store %arg5[%c24, %c0_26], %54 {strides = array<i32>} : memref<36x256xf32, #tpu.memory_space<vmem>>, vector<4x256xf32>,
    %c0_27 = arith.constant 0 : index
    %c0_28 = arith.constant 0 : index
    %c33 = arith.constant 33 : index
    %56 = vector.load %arg1[%c0_27, %c0_28, %c33] : memref<1x4x290xf32, #tpu.memory_space<vmem>>, vector<1x4x256xf32>
    %57 = vector.shape_cast %56 : vector<1x4x256xf32> to vector<4x256xf32>
    %c28 = arith.constant 28 : index
    %c0_29 = arith.constant 0 : index
    %58 = vector.load %arg5[%c28, %c0_29] : memref<36x256xf32, #tpu.memory_space<vmem>>, vector<4x256xf32>
    tpu.vector_store %arg5[%c28, %c0_29], %57 {strides = array<i32>} : memref<36x256xf32, #tpu.memory_space<vmem>>, vector<4x256xf32>,
    %c0_30 = arith.constant 0 : index
    %c0_31 = arith.constant 0 : index
    %c34 = arith.constant 34 : index
    %59 = vector.load %arg1[%c0_30, %c0_31, %c34] : memref<1x4x290xf32, #tpu.memory_space<vmem>>, vector<1x4x256xf32>
    %60 = vector.shape_cast %59 : vector<1x4x256xf32> to vector<4x256xf32>
    %61 = vector.broadcast %24 : vector<1x256xf32> to vector<4x256xf32>
    %62 = arith.mulf %60, %61 : vector<4x256xf32>
    %c32_32 = arith.constant 32 : index
    %c0_33 = arith.constant 0 : index
    %63 = vector.load %arg5[%c32_32, %c0_33] : memref<36x256xf32, #tpu.memory_space<vmem>>, vector<4x256xf32>
    tpu.vector_store %arg5[%c32_32, %c0_33], %62 {strides = array<i32>} : memref<36x256xf32, #tpu.memory_space<vmem>>, vector<4x256xf32>,
    %c0_34 = arith.constant 0 : index
    %c0_35 = arith.constant 0 : index
    %64 = vector.load %arg2[%c0_34, %c0_35] : memref<8x36xf32, #tpu.memory_space<vmem>>, vector<8x36xf32>
    %c0_36 = arith.constant 0 : index
    %c0_37 = arith.constant 0 : index
    %65 = vector.load %arg5[%c0_36, %c0_37] : memref<36x256xf32, #tpu.memory_space<vmem>>, vector<36x256xf32>
    %cst = arith.constant dense<0.000000e+00> : vector<8x256xf32>
    %66 = tpu.matmul %64, %65, %cst {dimension_numbers = #tpu.dot_dimension_numbers<[1], [0], [0], [1], [0, 0, 1, 1], [], []>} : vector<8x36xf32>, vector<36x256xf32>, vector<8x256xf32> -> vector<8x256xf32>
    %cst_38 = arith.constant dense<0.000000e+00> : vector<8xf32>
    %67 = vector.multi_reduction <add>, %66, %cst_38 [1] : vector<8x256xf32> to vector<8xf32>
    %68 = vector.shape_cast %67 : vector<8xf32> to vector<8x1xf32>
    %cst_39 = arith.constant 3.906250e-03 : f32
    %69 = vector.broadcast %cst_39 : f32 to vector<8x1xf32>
    %70 = arith.mulf %68, %69 : vector<8x1xf32>
    %71 = vector.broadcast %70 : vector<8x1xf32> to vector<8x256xf32>
    %72 = arith.subf %66, %71 : vector<8x256xf32>
    %73 = arith.mulf %72, %72 : vector<8x256xf32>
    %cst_40 = arith.constant dense<0.000000e+00> : vector<8xf32>
    %74 = vector.multi_reduction <add>, %73, %cst_40 [1] : vector<8x256xf32> to vector<8xf32>
    %75 = vector.shape_cast %74 : vector<8xf32> to vector<8x1xf32>
    %cst_41 = arith.constant 3.906250e-03 : f32
    %76 = vector.broadcast %cst_41 : f32 to vector<8x1xf32>
    %77 = arith.mulf %75, %76 : vector<8x1xf32>
    %cst_42 = arith.constant 9.99999974E-6 : f32
    %78 = vector.broadcast %cst_42 : f32 to vector<8x1xf32>
    %79 = arith.addf %77, %78 : vector<8x1xf32>
    %80 = math.rsqrt %79 : vector<8x1xf32>
    %81 = vector.broadcast %80 : vector<8x1xf32> to vector<8x256xf32>
    %82 = arith.mulf %72, %81 : vector<8x256xf32>
    %cst_43 = arith.constant 0.000000e+00 : f32
    %83 = vector.broadcast %cst_43 : f32 to vector<8x17xf32>
    %c0_44 = arith.constant 0 : index
    %c0_45 = arith.constant 0 : index
    %84 = vector.load %arg7[%c0_44, %c0_45] : memref<8x290xf32, #tpu.memory_space<vmem>>, vector<8x17xf32>
    tpu.vector_store %arg7[%c0_44, %c0_45], %83 {strides = array<i32>} : memref<8x290xf32, #tpu.memory_space<vmem>>, vector<8x17xf32>,
    %cst_46 = arith.constant 0.000000e+00 : f32
    %85 = vector.broadcast %cst_46 : f32 to vector<8x17xf32>
    %c0_47 = arith.constant 0 : index
    %c273 = arith.constant 273 : index
    %86 = vector.load %arg7[%c0_47, %c273] : memref<8x290xf32, #tpu.memory_space<vmem>>, vector<8x17xf32>
    tpu.vector_store %arg7[%c0_47, %c273], %85 {strides = array<i32>} : memref<8x290xf32, #tpu.memory_space<vmem>>, vector<8x17xf32>,
    %c0_48 = arith.constant 0 : index
    %c17_49 = arith.constant 17 : index
    %87 = vector.load %arg7[%c0_48, %c17_49] : memref<8x290xf32, #tpu.memory_space<vmem>>, vector<8x256xf32>
    tpu.vector_store %arg7[%c0_48, %c17_49], %82 {strides = array<i32>} : memref<8x290xf32, #tpu.memory_space<vmem>>, vector<8x256xf32>,
    %c0_50 = arith.constant 0 : index
    %c0_51 = arith.constant 0 : index
    %88 = vector.load %arg7[%c0_50, %c0_51] : memref<8x290xf32, #tpu.memory_space<vmem>>, vector<8x256xf32>
    %89 = vector.broadcast %20 : vector<1x256xf32> to vector<8x256xf32>
    %90 = arith.mulf %88, %89 : vector<8x256xf32>
    %c0_52 = arith.constant 0 : index
    %c0_53 = arith.constant 0 : index
    %91 = vector.load %arg6[%c0_52, %c0_53] : memref<72x256xf32, #tpu.memory_space<vmem>>, vector<8x256xf32>
    tpu.vector_store %arg6[%c0_52, %c0_53], %90 {strides = array<i32>} : memref<72x256xf32, #tpu.memory_space<vmem>>, vector<8x256xf32>,
    %c0_54 = arith.constant 0 : index
    %c1_55 = arith.constant 1 : index
    %92 = vector.load %arg7[%c0_54, %c1_55] : memref<8x290xf32, #tpu.memory_space<vmem>>, vector<8x256xf32>
    %c8_56 = arith.constant 8 : index
    %c0_57 = arith.constant 0 : index
    %93 = vector.load %arg6[%c8_56, %c0_57] : memref<72x256xf32, #tpu.memory_space<vmem>>, vector<8x256xf32>
    tpu.vector_store %arg6[%c8_56, %c0_57], %92 {strides = array<i32>} : memref<72x256xf32, #tpu.memory_space<vmem>>, vector<8x256xf32>,
    %c0_58 = arith.constant 0 : index
    %c2_59 = arith.constant 2 : index
    %94 = vector.load %arg7[%c0_58, %c2_59] : memref<8x290xf32, #tpu.memory_space<vmem>>, vector<8x256xf32>
    %95 = vector.broadcast %24 : vector<1x256xf32> to vector<8x256xf32>
    %96 = arith.mulf %94, %95 : vector<8x256xf32>
    %c16_60 = arith.constant 16 : index
    %c0_61 = arith.constant 0 : index
    %97 = vector.load %arg6[%c16_60, %c0_61] : memref<72x256xf32, #tpu.memory_space<vmem>>, vector<8x256xf32>
    tpu.vector_store %arg6[%c16_60, %c0_61], %96 {strides = array<i32>} : memref<72x256xf32, #tpu.memory_space<vmem>>, vector<8x256xf32>,
    %c0_62 = arith.constant 0 : index
    %c16_63 = arith.constant 16 : index
    %98 = vector.load %arg7[%c0_62, %c16_63] : memref<8x290xf32, #tpu.memory_space<vmem>>, vector<8x256xf32>
    %99 = vector.broadcast %20 : vector<1x256xf32> to vector<8x256xf32>
    %100 = arith.mulf %98, %99 : vector<8x256xf32>
    %c24_64 = arith.constant 24 : index
    %c0_65 = arith.constant 0 : index
    %101 = vector.load %arg6[%c24_64, %c0_65] : memref<72x256xf32, #tpu.memory_space<vmem>>, vector<8x256xf32>
    tpu.vector_store %arg6[%c24_64, %c0_65], %100 {strides = array<i32>} : memref<72x256xf32, #tpu.memory_space<vmem>>, vector<8x256xf32>,
    %c0_66 = arith.constant 0 : index
    %c17_67 = arith.constant 17 : index
    %102 = vector.load %arg7[%c0_66, %c17_67] : memref<8x290xf32, #tpu.memory_space<vmem>>, vector<8x256xf32>
    %c32_68 = arith.constant 32 : index
    %c0_69 = arith.constant 0 : index
    %103 = vector.load %arg6[%c32_68, %c0_69] : memref<72x256xf32, #tpu.memory_space<vmem>>, vector<8x256xf32>
    tpu.vector_store %arg6[%c32_68, %c0_69], %102 {strides = array<i32>} : memref<72x256xf32, #tpu.memory_space<vmem>>, vector<8x256xf32>,
    %c0_70 = arith.constant 0 : index
    %c18_71 = arith.constant 18 : index
    %104 = vector.load %arg7[%c0_70, %c18_71] : memref<8x290xf32, #tpu.memory_space<vmem>>, vector<8x256xf32>
    %105 = vector.broadcast %24 : vector<1x256xf32> to vector<8x256xf32>
    %106 = arith.mulf %104, %105 : vector<8x256xf32>
    %c40 = arith.constant 40 : index
    %c0_72 = arith.constant 0 : index
    %107 = vector.load %arg6[%c40, %c0_72] : memref<72x256xf32, #tpu.memory_space<vmem>>, vector<8x256xf32>
    tpu.vector_store %arg6[%c40, %c0_72], %106 {strides = array<i32>} : memref<72x256xf32, #tpu.memory_space<vmem>>, vector<8x256xf32>,
    %c0_73 = arith.constant 0 : index
    %c32_74 = arith.constant 32 : index
    %108 = vector.load %arg7[%c0_73, %c32_74] : memref<8x290xf32, #tpu.memory_space<vmem>>, vector<8x256xf32>
    %109 = vector.broadcast %20 : vector<1x256xf32> to vector<8x256xf32>
    %110 = arith.mulf %108, %109 : vector<8x256xf32>
    %c48 = arith.constant 48 : index
    %c0_75 = arith.constant 0 : index
    %111 = vector.load %arg6[%c48, %c0_75] : memref<72x256xf32, #tpu.memory_space<vmem>>, vector<8x256xf32>
    tpu.vector_store %arg6[%c48, %c0_75], %110 {strides = array<i32>} : memref<72x256xf32, #tpu.memory_space<vmem>>, vector<8x256xf32>,
    %c0_76 = arith.constant 0 : index
    %c33_77 = arith.constant 33 : index
    %112 = vector.load %arg7[%c0_76, %c33_77] : memref<8x290xf32, #tpu.memory_space<vmem>>, vector<8x256xf32>
    %c56 = arith.constant 56 : index
    %c0_78 = arith.constant 0 : index
    %113 = vector.load %arg6[%c56, %c0_78] : memref<72x256xf32, #tpu.memory_space<vmem>>, vector<8x256xf32>
    tpu.vector_store %arg6[%c56, %c0_78], %112 {strides = array<i32>} : memref<72x256xf32, #tpu.memory_space<vmem>>, vector<8x256xf32>,
    %c0_79 = arith.constant 0 : index
    %c34_80 = arith.constant 34 : index
    %114 = vector.load %arg7[%c0_79, %c34_80] : memref<8x290xf32, #tpu.memory_space<vmem>>, vector<8x256xf32>
    %115 = vector.broadcast %24 : vector<1x256xf32> to vector<8x256xf32>
    %116 = arith.mulf %114, %115 : vector<8x256xf32>
    %c64 = arith.constant 64 : index
    %c0_81 = arith.constant 0 : index
    %117 = vector.load %arg6[%c64, %c0_81] : memref<72x256xf32, #tpu.memory_space<vmem>>, vector<8x256xf32>
    tpu.vector_store %arg6[%c64, %c0_81], %116 {strides = array<i32>} : memref<72x256xf32, #tpu.memory_space<vmem>>, vector<8x256xf32>,
    %c0_82 = arith.constant 0 : index
    %c0_83 = arith.constant 0 : index
    %118 = vector.load %arg3[%c0_82, %c0_83] : memref<8x72xf32, #tpu.memory_space<vmem>>, vector<8x72xf32>
    %c0_84 = arith.constant 0 : index
    %c0_85 = arith.constant 0 : index
    %119 = vector.load %arg6[%c0_84, %c0_85] : memref<72x256xf32, #tpu.memory_space<vmem>>, vector<72x256xf32>
    %cst_86 = arith.constant dense<0.000000e+00> : vector<8x256xf32>
    %120 = tpu.matmul %118, %119, %cst_86 {dimension_numbers = #tpu.dot_dimension_numbers<[1], [0], [0], [1], [0, 0, 1, 1], [], []>} : vector<8x72xf32>, vector<72x256xf32>, vector<8x256xf32> -> vector<8x256xf32>
    %cst_87 = arith.constant dense<0.000000e+00> : vector<8xf32>
    %121 = vector.multi_reduction <add>, %120, %cst_87 [1] : vector<8x256xf32> to vector<8xf32>
    %122 = vector.shape_cast %121 : vector<8xf32> to vector<8x1xf32>
    %cst_88 = arith.constant 3.906250e-03 : f32
    %123 = vector.broadcast %cst_88 : f32 to vector<8x1xf32>
    %124 = arith.mulf %122, %123 : vector<8x1xf32>
    %125 = vector.broadcast %124 : vector<8x1xf32> to vector<8x256xf32>
    %126 = arith.subf %120, %125 : vector<8x256xf32>
    %127 = arith.mulf %126, %126 : vector<8x256xf32>
    %cst_89 = arith.constant dense<0.000000e+00> : vector<8xf32>
    %128 = vector.multi_reduction <add>, %127, %cst_89 [1] : vector<8x256xf32> to vector<8xf32>
    %129 = vector.shape_cast %128 : vector<8xf32> to vector<8x1xf32>
    %cst_90 = arith.constant 3.906250e-03 : f32
    %130 = vector.broadcast %cst_90 : f32 to vector<8x1xf32>
    %131 = arith.mulf %129, %130 : vector<8x1xf32>
    %cst_91 = arith.constant 9.99999974E-6 : f32
    %132 = vector.broadcast %cst_91 : f32 to vector<8x1xf32>
    %133 = arith.addf %131, %132 : vector<8x1xf32>
    %134 = math.rsqrt %133 : vector<8x1xf32>
    %135 = vector.broadcast %134 : vector<8x1xf32> to vector<8x256xf32>
    %136 = arith.mulf %126, %135 : vector<8x256xf32>
    %cst_92 = arith.constant 0.000000e+00 : f32
    %137 = vector.broadcast %cst_92 : f32 to vector<8x256xf32>
    %138 = arith.cmpf ogt, %136, %137 : vector<8x256xf32>
    %cst_93 = arith.constant 1.000000e-01 : f32
    %139 = vector.broadcast %cst_93 : f32 to vector<8x256xf32>
    %140 = arith.mulf %139, %136 : vector<8x256xf32>
    %141 = arith.select %138, %136, %140 : vector<8x256xi1>, vector<8x256xf32>
    %c0_94 = arith.constant 0 : index
    %c0_95 = arith.constant 0 : index
    %c0_96 = arith.constant 0 : index
    %142 = vector.load %arg4[%c0_94, %c0_95, %c0_96] : memref<1x8x256xf32, #tpu.memory_space<vmem>>, vector<1x8x256xf32>
    %143 = vector.shape_cast %142 : vector<1x8x256xf32> to vector<8x256xf32>
    %144 = vector.shape_cast %141 : vector<8x256xf32> to vector<1x8x256xf32>
    tpu.vector_store %arg4[%c0_94, %c0_95, %c0_96], %144 {strides = array<i32>} : memref<1x8x256xf32, #tpu.memory_space<vmem>>, vector<1x8x256xf32>,
    return
  }
  func.func @transform_0(%arg0: i32) -> (i32, i32, i32) {
    %c0_i32 = arith.constant 0 : i32
    %c0_i32_0 = arith.constant 0 : i32
    %c0_i32_1 = arith.constant 0 : i32
    return %arg0, %c0_i32, %c0_i32_0 : i32, i32, i32
  }
  func.func @transform_1(%arg0: i32) -> (i32, i32) {
    %c0_i32 = arith.constant 0 : i32
    %c0_i32_0 = arith.constant 0 : i32
    %c0_i32_1 = arith.constant 0 : i32
    return %c0_i32, %c0_i32_0 : i32, i32
  }
  func.func @transform_2(%arg0: i32) -> (i32, i32) {
    %c0_i32 = arith.constant 0 : i32
    %c0_i32_0 = arith.constant 0 : i32
    %c0_i32_1 = arith.constant 0 : i32
    return %c0_i32, %c0_i32_0 : i32, i32
  }
  func.func @transform_3(%arg0: i32) -> (i32, i32, i32) {
    %c0_i32 = arith.constant 0 : i32
    %c0_i32_0 = arith.constant 0 : i32
    %c0_i32_1 = arith.constant 0 : i32
    return %arg0, %c0_i32, %c0_i32_0 : i32, i32, i32
  }
}

</mosaic_0001>

<llo_original>
// kernel: tpu_custom_call.1
$region0: #{tpu_custom_call.1}
  #allocation0 [shape = 'u32[]', space=smem, size = 0x4, offset = 0x4, fixed_abs, tag = 'smem constant byte address 0x4 - core index']
  #allocation1 [shape = 'u32[144,128]{1,0:T(1,128)}', space=vmem, size = 0x12000, scoped, tag = 'internal scratch']
  #allocation2 [shape = 'f32[36,256]{1,0:T(8,128)}', space=vmem, size = 0xa000, scoped, tag = 'scratch operand']
  #allocation3 [shape = 'f32[72,256]{1,0:T(8,128)}', space=vmem, size = 0x12000, scoped, tag = 'scratch operand']
  #allocation4 [shape = 'f32[8,290]{1,0:T(8,128)}', space=vmem, size = 0x3000, scoped, tag = 'scratch operand']
  %s0 = inlined_call_operand.hbm [shape: f32[2,4,290], index: 0, kind: input, shape index: {}]
  %s1 = inlined_call_operand.hbm [shape: f32[8,36], index: 1, kind: input, shape index: {}]
  %s2 = inlined_call_operand.hbm [shape: f32[8,72], index: 2, kind: input, shape index: {}]
  %s3 = inlined_call_operand.hbm [shape: f32[2,8,256], index: 3, kind: output, shape index: {}]
  %s4 = sld [smem:[#allocation0]]
  $region57: #{tpu_custom_call.1} parent=0
    _
  %s6 = ssub.s32 1, %s4
  %s7 = scalar_select 0, %s6, %s4
  $region1: #{tpu_custom_call.1} parent=0
    #allocation5 [shape = 'u8[12288]{0}', space=vmem, size = 0x3000, scoped, tag = 'input window, operand 0']
    #allocation6 [shape = 's32[2]{0}', space=sflag, size = 0x8, scoped, tag = 'scoped memory for tpu_custom_call.1']
    #allocation7 [shape = 's32[2]{0}', space=sflag, size = 0x8, scoped, tag = 'scoped memory for tpu_custom_call.1']
    #allocation8 [shape = 'u8[4096]{0}', space=vmem, size = 0x1000, scoped, tag = 'input window, operand 1, single buffered']
    #allocation9 [shape = 's32[1]{0}', space=sflag, size = 0x4, scoped, tag = 'scoped memory for tpu_custom_call.1']
    #allocation10 [shape = 'u8[4096]{0}', space=vmem, size = 0x1000, scoped, tag = 'input window, operand 2, single buffered']
    #allocation11 [shape = 'u8[16384]{0}', space=vmem, size = 0x4000, scoped, tag = 'output window, operand 0']
    %8 = vsyncpa [#allocation6], 0
    %s9 = scalar_lea.sflag [#allocation6], 1
    %10 = vsyncpa %s9, 0
    %11 = vsyncpa [#allocation9], 0
    %12 = vsyncpa [#allocation7], 0
    %s13 = scalar_lea.sflag [#allocation7], 1
    %14 = vsyncpa %s13, 0
    loop: start=0, step=1, limit=4
    $region2: #{tpu_custom_call.1} parent=1 // loop_pre_header
      _
    $region3: #{tpu_custom_call.1} parent=1 // loop_header
      %s16 = sphi 0, %s20
      %p17 = scmp.ge.s32.totalorder %s16, 4
      %s26 = sphi 0, %s28
      %s29 = sphi 0, %s26
      %s30 = sphi 0, %s29
      %s46 = sphi 0, %s30
      %s50 = sphi 0, %s50
      %s52 = sphi 0, %s50
      %s53 = sphi 0, %s52
      %s67 = sphi 0, %s53
      %s71 = sphi 0, %s71
      %s73 = sphi 0, %s71
      %s74 = sphi 0, %s73
      %s88 = sphi 0, %s74
      %s94 = sphi 0, %s96
      %s97 = sphi 0, %s94
      %s98 = sphi 0, %s97
      %s114 = sphi 0, %s98
    $region4: #{tpu_custom_call.1} parent=1 // loop_header_branch
      %19 = sbr.rel (%p17) target = $region8
    $region5: #{tpu_custom_call.1} parent=1 // loop_body
      %s21 = ssub.s32 %s16, 1
      %s22 = ssub.s32 %s16, 2
      %s23 = sadd.s32 %s16, 1
      %s24 = ssub.s32 %s16, %s23
      %p25 = scmp.eq.s32.totalorder %s24, 0
      %s27 = sadd.s32 %s26, 1
      %s28 = scalar_select %p25, %s26, %s27
      %p31 = pneg %p25
      %p32 = scmp.eq.s32.totalorder %s16, 1
      %p33 = por %p31, %p32
      %p34 = scmp.ne.s32.totalorder %s26, %s29
      %p35 = scmp.eq.s32.totalorder %s16, 0
      %p36 = por %p34, %p35
      %p37 = scmp.ne.s32.totalorder %s26, %s29
      %p38 = scmp.eq.s32.totalorder %s21, 1
      %p39 = por %p37, %p38
      %p40 = scmp.ne.s32.totalorder %s29, %s30
      %p41 = scmp.eq.s32.totalorder %s21, 0
      %p42 = por %p40, %p41
      %p43 = scmp.ne.s32.totalorder %s29, %s30
      %p44 = scmp.eq.s32.totalorder %s22, 1
      %p45 = por %p43, %p44
      %p47 = scmp.ne.s32.totalorder %s30, %s46
      %p48 = scmp.eq.s32.totalorder %s22, 0
      %p49 = por %p47, %p48
      %s51 = sadd.s32 %s50, 1
      %p54 = scmp.eq.s32.totalorder %s16, 1
      %p55 = scmp.ne.s32.totalorder %s50, %s52
      %p56 = scmp.eq.s32.totalorder %s16, 0
      %p57 = por %p55, %p56
      %p58 = scmp.ne.s32.totalorder %s50, %s52
      %p59 = scmp.eq.s32.totalorder %s21, 1
      %p60 = por %p58, %p59
      %p61 = scmp.ne.s32.totalorder %s52, %s53
      %p62 = scmp.eq.s32.totalorder %s21, 0
      %p63 = por %p61, %p62
      %p64 = scmp.ne.s32.totalorder %s52, %s53
      %p65 = scmp.eq.s32.totalorder %s22, 1
      %p66 = por %p64, %p65
      %p68 = scmp.ne.s32.totalorder %s53, %s67
      %p69 = scmp.eq.s32.totalorder %s22, 0
      %p70 = por %p68, %p69
      %s72 = sadd.s32 %s71, 1
      %p75 = scmp.eq.s32.totalorder %s16, 1
      %p76 = scmp.ne.s32.totalorder %s71, %s73
      %p77 = scmp.eq.s32.totalorder %s16, 0
      %p78 = por %p76, %p77
      %p79 = scmp.ne.s32.totalorder %s71, %s73
      %p80 = scmp.eq.s32.totalorder %s21, 1
      %p81 = por %p79, %p80
      %p82 = scmp.ne.s32.totalorder %s73, %s74
      %p83 = scmp.eq.s32.totalorder %s21, 0
      %p84 = por %p82, %p83
      %p85 = scmp.ne.s32.totalorder %s73, %s74
      %p86 = scmp.eq.s32.totalorder %s22, 1
      %p87 = por %p85, %p86
      %p89 = scmp.ne.s32.totalorder %s74, %s88
      %p90 = scmp.eq.s32.totalorder %s22, 0
      %p91 = por %p89, %p90
      %s92 = ssub.s32 %s16, %s23
      %p93 = scmp.eq.s32.totalorder %s92, 0
      %s95 = sadd.s32 %s94, 1
      %s96 = scalar_select %p93, %s94, %s95
      %p99 = pneg %p93
      %p100 = scmp.eq.s32.totalorder %s16, 1
      %p101 = por %p99, %p100
      %p102 = scmp.ne.s32.totalorder %s94, %s97
      %p103 = scmp.eq.s32.totalorder %s16, 0
      %p104 = por %p102, %p103
      %p105 = scmp.ne.s32.totalorder %s94, %s97
      %p106 = scmp.eq.s32.totalorder %s21, 1
      %p107 = por %p105, %p106
      %p108 = scmp.ne.s32.totalorder %s97, %s98
      %p109 = scmp.eq.s32.totalorder %s21, 0
      %p110 = por %p108, %p109
      %p111 = scmp.ne.s32.totalorder %s97, %s98
      %p112 = scmp.eq.s32.totalorder %s22, 1
      %p113 = por %p111, %p112
      %p115 = scmp.ne.s32.totalorder %s98, %s114
      %p116 = scmp.eq.s32.totalorder %s22, 0
      %p117 = por %p115, %p116
      %p118 = scmp.le.s32.totalorder 1, %s16
      %p119 = scmp.lt.s32.totalorder %s16, 3
      %p120 = pnand %p118, %p119
      %p121 = pneg %p120
      // Predicated region
      $region9: #{tpu_custom_call.1} parent=5 // pred_check
        _
      $region10: #{tpu_custom_call.1} parent=5 // pred_check_branch
        %123 = sbr.rel (%p120) target = $region12
      $region11: #{tpu_custom_call.1} parent=5 // pred_region
        %s124 = ssub.s32 %s16, 1
        // Predicated region
        $region13: #{tpu_custom_call.1} parent=11 // pred_check
          %p125 = pneg %p63
        $region14: #{tpu_custom_call.1} parent=11 // pred_check_branch
          %127 = sbr.rel (%p125) target = $region16
        $region15: #{tpu_custom_call.1} parent=11 // pred_region
          %s129 = ssub.s32 128, 128
          %130 = vsyncadd [#allocation9], %s129
          %s132 = sshll.u32 [#allocation8], 4
          %s133 = int_to_ptr.vmem [resolvable:$true] %s132
          %135 = dma.hbm_to_vmem [thread:$0]  %s1, 128, %s133, [#allocation9]
        $region16: #{tpu_custom_call.1} parent=11 // pred_fallthru
          _
        // Predicated region
        $region17: #{tpu_custom_call.1} parent=11 // pred_check
          %p136 = pneg %p84
        $region18: #{tpu_custom_call.1} parent=11 // pred_check_branch
          %138 = sbr.rel (%p136) target = $region20
        $region19: #{tpu_custom_call.1} parent=11 // pred_region
          %s140 = ssub.s32 128, 128
          %141 = vsyncadd [#allocation9], %s140
          %s143 = sshll.u32 [#allocation10], 4
          %s144 = int_to_ptr.vmem [resolvable:$true] %s143
          %146 = dma.hbm_to_vmem [thread:$0]  %s2, 128, %s144, [#allocation9]
        $region20: #{tpu_custom_call.1} parent=11 // pred_fallthru
          _
      $region12: #{tpu_custom_call.1} parent=5 // pred_fallthru
        _
      %p147 = scmp.lt.s32.totalorder %s16, 2
      // Predicated region
      $region21: #{tpu_custom_call.1} parent=5 // pred_check
        %p148 = pneg %p147
      $region22: #{tpu_custom_call.1} parent=5 // pred_check_branch
        %150 = sbr.rel (%p148) target = $region24
      $region23: #{tpu_custom_call.1} parent=5 // pred_region
        // Predicated region
        $region25: #{tpu_custom_call.1} parent=23 // pred_check
          %p151 = pneg %p36
        $region26: #{tpu_custom_call.1} parent=23 // pred_check_branch
          %153 = sbr.rel (%p151) target = $region28
        $region27: #{tpu_custom_call.1} parent=23 // pred_region
          %s154 = sand.u32 %s26, 1
          %s155 = scalar_lea.sflag [#allocation6], %s154
          %s156 = sand.u32 %s26, 1
          %s157 = smul.addr %s156, 12
          %s158 = scalar_lea.vmem [#allocation5], %s157
          %s160 = ssub.s32 192, 192
          %161 = vsyncadd %s155, %s160
          %s162 = smul.addr %s16, 3
          %s163 = smul.addr %s162, 64
          %s164 = scalar_lea.hbm %s0, %s163
          %s166 = sshll.u32 %s158, 4
          %s167 = int_to_ptr.vmem [resolvable:$true] %s166
          %169 = dma.hbm_to_vmem [thread:$0]  %s164, 192, %s167, %s155
        $region28: #{tpu_custom_call.1} parent=23 // pred_fallthru
          _
      $region24: #{tpu_custom_call.1} parent=5 // pred_fallthru
        _
      %p170 = scmp.le.s32.totalorder 1, %s16
      %p171 = scmp.lt.s32.totalorder %s16, 3
      %p172 = pnand %p170, %p171
      %p173 = pneg %p172
      // Predicated region
      $region29: #{tpu_custom_call.1} parent=5 // pred_check
        _
      $region30: #{tpu_custom_call.1} parent=5 // pred_check_branch
        %175 = sbr.rel (%p172) target = $region32
      $region31: #{tpu_custom_call.1} parent=5 // pred_region
        %s176 = ssub.s32 %s16, 1
        %s177 = sand.u32 %s29, 1
        %s178 = scalar_lea.sflag [#allocation6], %s177
        %s179 = sand.u32 %s29, 1
        %s180 = smul.addr %s179, 12
        %s181 = scalar_lea.vmem [#allocation5], %s180
        // Predicated region
        $region33: #{tpu_custom_call.1} parent=31 // pred_check
          %p182 = pneg %p42
        $region34: #{tpu_custom_call.1} parent=31 // pred_check_branch
          %184 = sbr.rel (%p182) target = $region36
        $region35: #{tpu_custom_call.1} parent=31 // pred_region
          %185 = dma.done %s178, 192
        $region36: #{tpu_custom_call.1} parent=31 // pred_fallthru
          _
        // Predicated region
        $region37: #{tpu_custom_call.1} parent=31 // pred_check
          %p186 = pneg %p63
        $region38: #{tpu_custom_call.1} parent=31 // pred_check_branch
          %188 = sbr.rel (%p186) target = $region40
        $region39: #{tpu_custom_call.1} parent=31 // pred_region
          %189 = dma.done [#allocation9], 128
        $region40: #{tpu_custom_call.1} parent=31 // pred_fallthru
          _
        // Predicated region
        $region41: #{tpu_custom_call.1} parent=31 // pred_check
          %p190 = pneg %p84
        $region42: #{tpu_custom_call.1} parent=31 // pred_check_branch
          %192 = sbr.rel (%p190) target = $region44
        $region43: #{tpu_custom_call.1} parent=31 // pred_region
          %193 = dma.done [#allocation9], 128
        $region44: #{tpu_custom_call.1} parent=31 // pred_fallthru
          _
        %s194 = sand.u32 %s29, 1
        %s195 = scalar_lea.sflag [#allocation6], %s194
        %s196 = sand.u32 %s29, 1
        %s197 = smul.addr %s196, 12
        %s198 = scalar_lea.vmem [#allocation5], %s197
        %p199 = pneg %p42
        %p200 = pneg %p39
        %p201 = pneg %p63
        %p202 = pneg %p60
        %p203 = pneg %p84
        %p204 = pneg %p81
        %p205 = pneg %p110
        %p206 = pneg %p107
        %s207 = sand.u32 %s97, 1
        %s208 = scalar_lea.sflag [#allocation7], %s207
        %s209 = sand.u32 %s97, 1
        %s210 = smul.addr %s209, 16
        %s211 = scalar_lea.vmem [#allocation11], %s210
        %v212 = vlaneseq
        %v213 = vand.u32 %v212, 127
        %v214 = vadd.s32 %v213, 128
        %vm215 = vcmp.lt.s32.totalorder %v213, 0
        %v216 = vsub.s32 0, %v213
        %v217 = vsel %vm215, %v216, %v213
        %v218 = vshrl.u32 %v217, 4
        %v219 = vand.u32 %v217, 15
        %v220 = vsub.s32 0, %v219
        %v221 = vsel %vm215, %v220, %v219
        %vm222 = vcmp.lt.s32.totalorder %v214, 0
        %v223 = vsub.s32 0, %v214
        %v224 = vsel %vm222, %v223, %v214
        %v225 = vshrl.u32 %v224, 4
        %v226 = vand.u32 %v224, 15
        %v227 = vsub.s32 0, %v226
        %v228 = vsel %vm222, %v227, %v226
        %vm229 = vcmp.ne.s32.totalorder %v221, 0
        %vm230 = vcmp.ne.s32.totalorder %v228, 0
        %vm231 = vcmp.lt.s32.totalorder %v221, 0
        %vm232 = vcmp.lt.s32.totalorder %v228, 0
        %vm233 = vmand %vm231, %vm229
        %vm234 = vmand %vm232, %vm230
        %v235 = vadd.s32 %v221, 16
        %v236 = vadd.s32 %v228, 16
        %v237 = vsel %vm233, %v235, %v221
        %v238 = vsel %vm234, %v236, %v228
        %vm239 = vcmp.ne.s32.totalorder %v237, 0
        %vm240 = vcmp.ne.s32.totalorder %v238, 0
        %v241 = vsel %vm239, 1, 0
        %v242 = vsel %vm240, 1, 0
        %v243 = vcvt.s32.f32 %v241
        %v244 = vcvt.s32.f32 %v242
        %vm245 = vcmp.ne.s32.totalorder %v237, 15
        %vm246 = vcmp.ne.s32.totalorder %v238, 15
        %v247 = vsel %vm245, 1, 0
        %v248 = vsel %vm246, 1, 0
        %v249 = vcvt.s32.f32 %v247
        %v250 = vcvt.s32.f32 %v248
        %v251 = vld [vmem:[%s181] sm:$0xff]
        %v254 = vcombine.low %v243, %v244
        %v256 = vmul.f32 %v251, %v254
        %v258 = vcombine.high %v256, %v256
        %260 = vst [vmem:[#allocation2] sm:$0xf] %v256
        %261 = vst [vmem:[#allocation2 + $0x8] sm:$0xf] %v258
        %v262 = vld [vmem:[%s181] sm:$0xff]
        %v263 = vld [vmem:[%s181 + $0x8] sm:$0xf]
        %v266 = vcombine.low %v262, %v262
        %v267 = vcombine.low %v263, %v263
        %268 = vrot.lane.b32.xlu0 %v266, 127
        %v269 = vpop.permute.xlu0 %268
        %270 = vrot.lane.b32.xlu0 %v262, 127
        %v271 = vpop.permute.xlu0 %270
        %272 = vrot.lane.b32.xlu0 %v267, 127
        %v273 = vpop.permute.xlu0 %272
        %vm274 = vcmask 1039360
        %v275 = vsel %vm274, %v269, %v271
        %v276 = vsel %vm274, %v271, %v273
        %279 = vst [vmem:[#allocation2] sm:$0xf0] %v275
        %280 = vst [vmem:[#allocation2 + $0x8] sm:$0xf0] %v276
        %v281 = vld [vmem:[%s181] sm:$0xff]
        %v282 = vld [vmem:[%s181 + $0x8] sm:$0xf]
        %v285 = vcombine.low %v249, %v250
        %286 = vrot.lane.b32.xlu0 %v285, 2
        %v287 = vpop.permute.xlu0 %286
        %v288 = vrot.slane %v287, 4
        %vm289 = vcmask 15360
        %v290 = vsel %vm289, %v288, %v287
        %v293 = vmul.f32 %v281, %v290
        %v294 = vmul.f32 %v282, %v288
        %v297 = vcombine.high %v293, %v293
        %298 = vrot.lane.b32.xlu0 %v293, 126
        %v299 = vpop.permute.xlu0 %298
        %300 = vrot.lane.b32.xlu0 %v297, 126
        %v301 = vpop.permute.xlu0 %300
        %302 = vrot.lane.b32.xlu0 %v294, 126
        %v303 = vpop.permute.xlu0 %302
        %vm304 = vcmask 1031168
        %v305 = vsel %vm304, %v299, %v301
        %v306 = vsel %vm304, %v301, %v303
        %309 = vst [vmem:[#allocation2 + $0x10] sm:$0xf] %v305
        %310 = vst [vmem:[#allocation2 + $0x18] sm:$0xf] %v306
        %v311 = vld [vmem:[%s181] sm:$0xff]
        %v312 = vld [vmem:[%s181 + $0x8] sm:$0xf]
        %313 = vrot.lane.b32.xlu0 %v254, 16
        %v314 = vpop.permute.xlu0 %313
        %v315 = vrot.slane %v314, 4
        %vm316 = vcmask 130048
        %v317 = vsel %vm316, %v315, %v314
        %v320 = vmul.f32 %v311, %v317
        %v321 = vmul.f32 %v312, %v315
        %v324 = vcombine.low %v320, %v320
        %v325 = vcombine.low %v321, %v321
        %326 = vrot.lane.b32.xlu0 %v324, 112
        %v327 = vpop.permute.xlu0 %326
        %328 = vrot.lane.b32.xlu0 %v320, 112
        %v329 = vpop.permute.xlu0 %328
        %330 = vrot.lane.b32.xlu0 %v325, 112
        %v331 = vpop.permute.xlu0 %330
        %vm332 = vcmask 916480
        %v333 = vsel %vm332, %v327, %v329
        %v334 = vsel %vm332, %v329, %v331
        %337 = vst [vmem:[#allocation2 + $0x10] sm:$0xf0] %v333
        %338 = vst [vmem:[#allocation2 + $0x18] sm:$0xf0] %v334
        %v339 = vld [vmem:[%s181] sm:$0xff]
        %v340 = vld [vmem:[%s181 + $0x8] sm:$0xf]
        %v343 = vcombine.high %v339, %v339
        %344 = vrot.lane.b32.xlu0 %v339, 111
        %v345 = vpop.permute.xlu0 %344
        %346 = vrot.lane.b32.xlu0 %v343, 111
        %v347 = vpop.permute.xlu0 %346
        %348 = vrot.lane.b32.xlu0 %v340, 111
        %v349 = vpop.permute.xlu0 %348
        %vm350 = vcmask 908288
        %v351 = vsel %vm350, %v345, %v347
        %v352 = vsel %vm350, %v347, %v349
        %355 = vst [vmem:[#allocation2 + $0x20] sm:$0xf] %v351
        %356 = vst [vmem:[#allocation2 + $0x28] sm:$0xf] %v352
        %v357 = vld [vmem:[%s181] sm:$0xff]
        %v358 = vld [vmem:[%s181 + $0x8] sm:$0xf]
        %359 = vrot.lane.b32.xlu0 %v285, 18
        %v360 = vpop.permute.xlu0 %359
        %v361 = vrot.slane %v360, 4
        %vm362 = vcmask 146432
        %v363 = vsel %vm362, %v361, %v360
        %v366 = vmul.f32 %v357, %v363
        %v367 = vmul.f32 %v358, %v361
        %v370 = vcombine.low %v366, %v366
        %v371 = vcombine.low %v367, %v367
        %372 = vrot.lane.b32.xlu0 %v370, 110
        %v373 = vpop.permute.xlu0 %372
        %374 = vrot.lane.b32.xlu0 %v366, 110
        %v375 = vpop.permute.xlu0 %374
        %376 = vrot.lane.b32.xlu0 %v371, 110
        %v377 = vpop.permute.xlu0 %376
        %vm378 = vcmask 900096
        %v379 = vsel %vm378, %v373, %v375
        %v380 = vsel %vm378, %v375, %v377
        %383 = vst [vmem:[#allocation2 + $0x20] sm:$0xf0] %v379
        %384 = vst [vmem:[#allocation2 + $0x28] sm:$0xf0] %v380
        %v385 = vld [vmem:[%s181] sm:$0xff]
        %v386 = vld [vmem:[%s181 + $0x8] sm:$0xf]
        %387 = vrot.lane.b32.xlu0 %v254, 32
        %v388 = vpop.permute.xlu0 %387
        %v389 = vrot.slane %v388, 4
        %vm390 = vcmask 261120
        %v391 = vsel %vm390, %v389, %v388
        %v394 = vmul.f32 %v385, %v391
        %v395 = vmul.f32 %v386, %v389
        %v398 = vcombine.high %v394, %v394
        %399 = vrot.lane.b32.xlu0 %v394, 96
        %v400 = vpop.permute.xlu0 %399
        %401 = vrot.lane.b32.xlu0 %v398, 96
        %v402 = vpop.permute.xlu0 %401
        %403 = vrot.lane.b32.xlu0 %v395, 96
        %v404 = vpop.permute.xlu0 %403
        %vm405 = vcmask 785408
        %v406 = vsel %vm405, %v400, %v402
        %v407 = vsel %vm405, %v402, %v404
        %410 = vst [vmem:[#allocation2 + $0x30] sm:$0xf] %v406
        %411 = vst [vmem:[#allocation2 + $0x38] sm:$0xf] %v407
        %v412 = vld [vmem:[%s181] sm:$0xff]
        %v413 = vld [vmem:[%s181 + $0x8] sm:$0xf]
        %v416 = vcombine.low %v412, %v412
        %v417 = vcombine.low %v413, %v413
        %418 = vrot.lane.b32.xlu0 %v416, 95
        %v419 = vpop.permute.xlu0 %418
        %420 = vrot.lane.b32.xlu0 %v412, 95
        %v421 = vpop.permute.xlu0 %420
        %422 = vrot.lane.b32.xlu0 %v417, 95
        %v423 = vpop.permute.xlu0 %422
        %vm424 = vcmask 777216
        %v425 = vsel %vm424, %v419, %v421
        %v426 = vsel %vm424, %v421, %v423
        %429 = vst [vmem:[#allocation2 + $0x30] sm:$0xf0] %v425
        %430 = vst [vmem:[#allocation2 + $0x38] sm:$0xf0] %v426
        %v431 = vld [vmem:[%s181] sm:$0xff]
        %v432 = vld [vmem:[%s181 + $0x8] sm:$0xf]
        %433 = vrot.lane.b32.xlu0 %v285, 34
        %v434 = vpop.permute.xlu0 %433
        %v435 = vrot.slane %v434, 4
        %vm436 = vcmask 277504
        %v437 = vsel %vm436, %v435, %v434
        %v440 = vmul.f32 %v431, %v437
        %v441 = vmul.f32 %v432, %v435
        %v444 = vcombine.high %v440, %v440
        %445 = vrot.lane.b32.xlu0 %v440, 94
        %v446 = vpop.permute.xlu0 %445
        %447 = vrot.lane.b32.xlu0 %v444, 94
        %v448 = vpop.permute.xlu0 %447
        %449 = vrot.lane.b32.xlu0 %v441, 94
        %v450 = vpop.permute.xlu0 %449
        %vm451 = vcmask 769024
        %v452 = vsel %vm451, %v446, %v448
        %v453 = vsel %vm451, %v448, %v450
        %456 = vst [vmem:[#allocation2 + $0x40] sm:$0xf] %v452
        %457 = vst [vmem:[#allocation2 + $0x48] sm:$0xf] %v453
        %v458 = vld [vmem:[#allocation8] sm:$0xff]
        %v459 = vld [vmem:[#allocation2] sm:$0xff]
        %v460 = vld [vmem:[#allocation2 + $0x8] sm:$0xff]
        %v461 = vld [vmem:[#allocation2 + $0x10] sm:$0xff]
        %v462 = vld [vmem:[#allocation2 + $0x18] sm:$0xff]
        %v463 = vld [vmem:[#allocation2 + $0x20] sm:$0xff]
        %v464 = vld [vmem:[#allocation2 + $0x28] sm:$0xff]
        %v465 = vld [vmem:[#allocation2 + $0x30] sm:$0xff]
        %v466 = vld [vmem:[#allocation2 + $0x38] sm:$0xff]
        %v467 = vld [vmem:[#allocation2 + $0x40] sm:$0xf]
        %v468 = vld [vmem:[#allocation2 + $0x48] sm:$0xf]
        %vm469 = vcmask 293888
        %v471 = vsel %vm469, %v458, 0
        %vm473 = vcmask 1043456
        %v475 = vsel %vm473, %v467, 0
        %v478 = vsel %vm473, %v468, 0
        %480 = vmatprep.subr.mxu0 %v460
        %481 = vmatpush1.msra.mxu0 %v459
        %482 = vmatprep.subr.mxu0 %v462
        %483 = vmatpush1.msra.mxu0 %v461
        %484 = vmatprep.subr.mxu0 %v464
        %485 = vmatpush1.msra.mxu0 %v463
        %486 = vmatprep.subr.mxu0 %v466
        %487 = vmatpush1.msra.mxu0 %v465
        %488 = vmatprep.subr.mxu0 %v478
        %489 = vmatpush1.msra.mxu0 %v475
        %490 = vmatprep.subr.mxu0 0.0
        %491 = vmatpush1.msra.mxu0 0.0
        %492 = vmatprep.subr.mxu0 0.0
        %493 = vmatpush1.msra.mxu0 0.0
        %494 = vmatprep.subr.mxu0 0.0
        %495 = vmatpush1.msra.mxu0 0.0
        %496 = vmatprep.subr.mxu0 0.0
        %497 = vmatpush1.msra.mxu0 0.0
        %498 = vmatprep.subr.mxu0 0.0
        %499 = vmatpush1.msra.mxu0 0.0
        %500 = vmatprep.subr.mxu0 0.0
        %501 = vmatpush1.msra.mxu0 0.0
        %502 = vmatprep.subr.mxu0 0.0
        %503 = vmatpush1.msra.mxu0 0.0
        %504 = vmatprep.subr.mxu0 0.0
        %505 = vmatpush1.msra.mxu0 0.0
        %506 = vmatprep.subr.mxu0 0.0
        %507 = vmatpush1.msra.mxu0 0.0
        %508 = vmatprep.subr.mxu0 0.0
        %509 = vmatpush1.msra.mxu0 0.0
        %510 = vmatprep.subr.mxu0 0.0
        %511 = vmatpush1.msra.mxu0 0.0
        %512 = vmatprep.subr.mxu0 0.0
        %513 = vmatpush1.msra.mxu0 0.0
        %514 = vmatprep.subr.mxu0 0.0
        %515 = vmatpush1.msra.mxu0 0.0
        %516 = vmatprep.subr.mxu0 0.0
        %517 = vmatpush1.msra.mxu0 0.0
        %518 = vmatprep.subr.mxu0 0.0
        %519 = vmatpush1.msra.mxu0 0.0
        %520 = vmatprep.subr.mxu0 0.0
        %521 = vmatpush1.msra.mxu0 0.0
        %522 = vmatprep.subr.mxu0 0.0
        %523 = vmatpush1.msra.mxu0 0.0
        %524 = vmatprep.subr.mxu0 0.0
        %525 = vmatpush1.msra.mxu0 0.0
        %526 = vmatprep.subr.mxu0 0.0
        %527 = vmatpush1.msra.mxu0 0.0
        %528 = vmatprep.subr.mxu0 0.0
        %529 = vmatpush1.msra.mxu0 0.0
        %530 = vmatprep.subr.mxu0 0.0
        %531 = vmatpush1.msra.mxu0 0.0
        %532 = vmatprep.subr.mxu0 0.0
        %533 = vmatpush1.msra.mxu0 0.0
        %534 = vmatprep.subr.mxu0 0.0
        %535 = vmatpush1.msra.mxu0 0.0
        %536 = vmatprep.subr.mxu0 0.0
        %537 = vmatpush1.msra.mxu0 0.0
        %538 = vmatprep.subr.mxu0 0.0
        %539 = vmatpush1.msra.mxu0 0.0
        %540 = vmatprep.subr.mxu0 0.0
        %541 = vmatpush1.msra.mxu0 0.0
        %542 = vmatprep.subr.mxu0 0.0
        %543 = vmatpush1.msra.mxu0 0.0
        %544 = vmatprep.mubr.f32.mxu0 0.0
        %545 = vmatmul.mubr.f32.gmra.mrb[0].mxu0 %v471
        %v546 = vpop.f32.mrb[0].mxu0
        %v547 = vadd.f32 0.0, %v546
        %v548 = vpop.f32.mrb[0].mxu0
        %v549 = vadd.f32 0.0, %v548
        %550 = vdwg.mxu0
        %v551 = vadd.f32 %v547, %v549
        %552 = vadd.xlane.f32.xlu0 %v551
        %v553 = vpop.xlane.xlu0 %552
        %v554 = vmul.f32 %v553, 0.00390625
        %v555 = vsub.f32 %v547, %v554
        %v556 = vsub.f32 %v549, %v554
        %v557 = vmul.f32 %v555, %v555
        %v558 = vmul.f32 %v556, %v556
        %v559 = vadd.f32 %v557, %v558
        %560 = vadd.xlane.f32.xlu0 %v559
        %v561 = vpop.xlane.xlu0 %560
        %v562 = vmul.f32 %v561, 0.00390625
        %v563 = vadd.f32 %v562, 1e-05
        %v564 = vrsqrt.pop %v563
        %v565 = vmul.f32 %v555, %v564
        %v566 = vmul.f32 %v556, %v564
        %vm567 = vcmask 138240
        %568 = vst.msk [vmem:[#allocation4] sm:$0xff] %vm567, 0.0
        %vm569 = vcmask 277640
        %570 = vst.msk [vmem:[#allocation4 + $0x10] sm:$0xff] %vm569, 0.0
        %573 = vrot.lane.b32.xlu0 %v565, 17
        %v574 = vpop.permute.xlu0 %573
        %575 = vrot.lane.b32.xlu0 %v566, 17
        %v576 = vpop.permute.xlu0 %575
        %v577 = vsel %vm567, %v574, %v576
        %vm581 = vcmask 1047688
        %582 = vst.msk [vmem:[#allocation4] sm:$0xff] %vm581, %v574
        %583 = vst [vmem:[#allocation4 + $0x8] sm:$0xff] %v577
        %584 = vst.msk [vmem:[#allocation4 + $0x10] sm:$0xff] %vm567, %v576
        %v585 = vld [vmem:[#allocation4] sm:$0xff]
        %v586 = vld [vmem:[#allocation4 + $0x8] sm:$0xff]
        %v587 = vmul.f32 %v585, %v243
        %v588 = vmul.f32 %v586, %v244
        %589 = vst [vmem:[#allocation3] sm:$0xff] %v587
        %590 = vst [vmem:[#allocation3 + $0x8] sm:$0xff] %v588
        %v591 = vld [vmem:[#allocation4] sm:$0xff]
        %v592 = vld [vmem:[#allocation4 + $0x8] sm:$0xff]
        %v593 = vld [vmem:[#allocation4 + $0x10] sm:$0xff]
        %597 = vrot.lane.b32.xlu0 %v591, 127
        %v598 = vpop.permute.xlu0 %597
        %599 = vrot.lane.b32.xlu0 %v592, 127
        %v600 = vpop.permute.xlu0 %599
        %601 = vrot.lane.b32.xlu0 %v593, 127
        %v602 = vpop.permute.xlu0 %601
        %v603 = vsel %vm274, %v598, %v600
        %v604 = vsel %vm274, %v600, %v602
        %607 = vst [vmem:[#allocation3 + $0x10] sm:$0xff] %v603
        %608 = vst [vmem:[#allocation3 + $0x18] sm:$0xff] %v604
        %v609 = vld [vmem:[#allocation4] sm:$0xff]
        %v610 = vld [vmem:[#allocation4 + $0x8] sm:$0xff]
        %v611 = vld [vmem:[#allocation4 + $0x10] sm:$0xff]
        %612 = vrot.lane.b32.xlu0 %v249, 2
        %v613 = vpop.permute.xlu0 %612
        %614 = vrot.lane.b32.xlu0 %v250, 2
        %v615 = vpop.permute.xlu0 %614
        %v616 = vsel %vm289, %v613, %v615
        %v620 = vmul.f32 %v609, %v613
        %v621 = vmul.f32 %v610, %v616
        %v622 = vmul.f32 %v611, %v615
        %626 = vrot.lane.b32.xlu0 %v620, 126
        %v627 = vpop.permute.xlu0 %626
        %628 = vrot.lane.b32.xlu0 %v621, 126
        %v629 = vpop.permute.xlu0 %628
        %630 = vrot.lane.b32.xlu0 %v622, 126
        %v631 = vpop.permute.xlu0 %630
        %v632 = vsel %vm304, %v627, %v629
        %v633 = vsel %vm304, %v629, %v631
        %636 = vst [vmem:[#allocation3 + $0x20] sm:$0xff] %v632
        %637 = vst [vmem:[#allocation3 + $0x28] sm:$0xff] %v633
        %v638 = vld [vmem:[#allocation4] sm:$0xff]
        %v639 = vld [vmem:[#allocation4 + $0x8] sm:$0xff]
        %v640 = vld [vmem:[#allocation4 + $0x10] sm:$0xff]
        %641 = vrot.lane.b32.xlu0 %v243, 16
        %v642 = vpop.permute.xlu0 %641
        %643 = vrot.lane.b32.xlu0 %v244, 16
        %v644 = vpop.permute.xlu0 %643
        %v645 = vsel %vm316, %v642, %v644
        %v649 = vmul.f32 %v638, %v642
        %v650 = vmul.f32 %v639, %v645
        %v651 = vmul.f32 %v640, %v644
        %655 = vrot.lane.b32.xlu0 %v649, 112
        %v656 = vpop.permute.xlu0 %655
        %657 = vrot.lane.b32.xlu0 %v650, 112
        %v658 = vpop.permute.xlu0 %657
        %659 = vrot.lane.b32.xlu0 %v651, 112
        %v660 = vpop.permute.xlu0 %659
        %v661 = vsel %vm332, %v656, %v658
        %v662 = vsel %vm332, %v658, %v660
        %665 = vst [vmem:[#allocation3 + $0x30] sm:$0xff] %v661
        %666 = vst [vmem:[#allocation3 + $0x38] sm:$0xff] %v662
        %v667 = vld [vmem:[#allocation4] sm:$0xff]
        %v668 = vld [vmem:[#allocation4 + $0x8] sm:$0xff]
        %v669 = vld [vmem:[#allocation4 + $0x10] sm:$0xff]
        %673 = vrot.lane.b32.xlu0 %v667, 111
        %v674 = vpop.permute.xlu0 %673
        %675 = vrot.lane.b32.xlu0 %v668, 111
        %v676 = vpop.permute.xlu0 %675
        %677 = vrot.lane.b32.xlu0 %v669, 111
        %v678 = vpop.permute.xlu0 %677
        %v679 = vsel %vm350, %v674, %v676
        %v680 = vsel %vm350, %v676, %v678
        %683 = vst [vmem:[#allocation3 + $0x40] sm:$0xff] %v679
        %684 = vst [vmem:[#allocation3 + $0x48] sm:$0xff] %v680
        %v685 = vld [vmem:[#allocation4] sm:$0xff]
        %v686 = vld [vmem:[#allocation4 + $0x8] sm:$0xff]
        %v687 = vld [vmem:[#allocation4 + $0x10] sm:$0xff]
        %688 = vrot.lane.b32.xlu0 %v249, 18
        %v689 = vpop.permute.xlu0 %688
        %690 = vrot.lane.b32.xlu0 %v250, 18
        %v691 = vpop.permute.xlu0 %690
        %v692 = vsel %vm362, %v689, %v691
        %v696 = vmul.f32 %v685, %v689
        %v697 = vmul.f32 %v686, %v692
        %v698 = vmul.f32 %v687, %v691
        %702 = vrot.lane.b32.xlu0 %v696, 110
        %v703 = vpop.permute.xlu0 %702
        %704 = vrot.lane.b32.xlu0 %v697, 110
        %v705 = vpop.permute.xlu0 %704
        %706 = vrot.lane.b32.xlu0 %v698, 110
        %v707 = vpop.permute.xlu0 %706
        %v708 = vsel %vm378, %v703, %v705
        %v709 = vsel %vm378, %v705, %v707
        %712 = vst [vmem:[#allocation3 + $0x50] sm:$0xff] %v708
        %713 = vst [vmem:[#allocation3 + $0x58] sm:$0xff] %v709
        %v714 = vld [vmem:[#allocation4] sm:$0xff]
        %v715 = vld [vmem:[#allocation4 + $0x8] sm:$0xff]
        %v716 = vld [vmem:[#allocation4 + $0x10] sm:$0xff]
        %717 = vrot.lane.b32.xlu0 %v243, 32
        %v718 = vpop.permute.xlu0 %717
        %719 = vrot.lane.b32.xlu0 %v244, 32
        %v720 = vpop.permute.xlu0 %719
        %v721 = vsel %vm390, %v718, %v720
        %v725 = vmul.f32 %v714, %v718
        %v726 = vmul.f32 %v715, %v721
        %v727 = vmul.f32 %v716, %v720
        %731 = vrot.lane.b32.xlu0 %v725, 96
        %v732 = vpop.permute.xlu0 %731
        %733 = vrot.lane.b32.xlu0 %v726, 96
        %v734 = vpop.permute.xlu0 %733
        %735 = vrot.lane.b32.xlu0 %v727, 96
        %v736 = vpop.permute.xlu0 %735
        %v737 = vsel %vm405, %v732, %v734
        %v738 = vsel %vm405, %v734, %v736
        %741 = vst [vmem:[#allocation3 + $0x60] sm:$0xff] %v737
        %742 = vst [vmem:[#allocation3 + $0x68] sm:$0xff] %v738
        %v743 = vld [vmem:[#allocation4] sm:$0xff]
        %v744 = vld [vmem:[#allocation4 + $0x8] sm:$0xff]
        %v745 = vld [vmem:[#allocation4 + $0x10] sm:$0xff]
        %749 = vrot.lane.b32.xlu0 %v743, 95
        %v750 = vpop.permute.xlu0 %749
        %751 = vrot.lane.b32.xlu0 %v744, 95
        %v752 = vpop.permute.xlu0 %751
        %753 = vrot.lane.b32.xlu0 %v745, 95
        %v754 = vpop.permute.xlu0 %753
        %v755 = vsel %vm424, %v750, %v752
        %v756 = vsel %vm424, %v752, %v754
        %759 = vst [vmem:[#allocation3 + $0x70] sm:$0xff] %v755
        %760 = vst [vmem:[#allocation3 + $0x78] sm:$0xff] %v756
        %v761 = vld [vmem:[#allocation4] sm:$0xff]
        %v762 = vld [vmem:[#allocation4 + $0x8] sm:$0xff]
        %v763 = vld [vmem:[#allocation4 + $0x10] sm:$0xff]
        %764 = vrot.lane.b32.xlu0 %v249, 34
        %v765 = vpop.permute.xlu0 %764
        %766 = vrot.lane.b32.xlu0 %v250, 34
        %v767 = vpop.permute.xlu0 %766
        %v768 = vsel %vm436, %v765, %v767
        %v772 = vmul.f32 %v761, %v765
        %v773 = vmul.f32 %v762, %v768
        %v774 = vmul.f32 %v763, %v767
        %778 = vrot.lane.b32.xlu0 %v772, 94
        %v779 = vpop.permute.xlu0 %778
        %780 = vrot.lane.b32.xlu0 %v773, 94
        %v781 = vpop.permute.xlu0 %780
        %782 = vrot.lane.b32.xlu0 %v774, 94
        %v783 = vpop.permute.xlu0 %782
        %v784 = vsel %vm451, %v779, %v781
        %v785 = vsel %vm451, %v781, %v783
        %788 = vst [vmem:[#allocation3 + $0x80] sm:$0xff] %v784
        %789 = vst [vmem:[#allocation3 + $0x88] sm:$0xff] %v785
        %v790 = vld [vmem:[#allocation10] sm:$0xff]
        %v791 = vld [vmem:[#allocation3] sm:$0xff]
        %v792 = vld [vmem:[#allocation3 + $0x8] sm:$0xff]
        %v793 = vld [vmem:[#allocation3 + $0x10] sm:$0xff]
        %v794 = vld [vmem:[#allocation3 + $0x18] sm:$0xff]
        %v795 = vld [vmem:[#allocation3 + $0x20] sm:$0xff]
        %v796 = vld [vmem:[#allocation3 + $0x28] sm:$0xff]
        %v797 = vld [vmem:[#allocation3 + $0x30] sm:$0xff]
        %v798 = vld [vmem:[#allocation3 + $0x38] sm:$0xff]
        %v799 = vld [vmem:[#allocation3 + $0x40] sm:$0xff]
        %v800 = vld [vmem:[#allocation3 + $0x48] sm:$0xff]
        %v801 = vld [vmem:[#allocation3 + $0x50] sm:$0xff]
        %v802 = vld [vmem:[#allocation3 + $0x58] sm:$0xff]
        %v803 = vld [vmem:[#allocation3 + $0x60] sm:$0xff]
        %v804 = vld [vmem:[#allocation3 + $0x68] sm:$0xff]
        %v805 = vld [vmem:[#allocation3 + $0x70] sm:$0xff]
        %v806 = vld [vmem:[#allocation3 + $0x78] sm:$0xff]
        %v807 = vld [vmem:[#allocation3 + $0x80] sm:$0xff]
        %v808 = vld [vmem:[#allocation3 + $0x88] sm:$0xff]
        %vm809 = vcmask 588800
        %v811 = vsel %vm809, %v790, 0
        %813 = vmatprep.subr.mxu0 %v792
        %814 = vmatpush1.msra.mxu0 %v791
        %815 = vmatprep.subr.mxu0 %v794
        %816 = vmatpush1.msra.mxu0 %v793
        %817 = vmatprep.subr.mxu0 %v796
        %818 = vmatpush1.msra.mxu0 %v795
        %819 = vmatprep.subr.mxu0 %v798
        %820 = vmatpush1.msra.mxu0 %v797
        %821 = vmatprep.subr.mxu0 %v800
        %822 = vmatpush1.msra.mxu0 %v799
        %823 = vmatprep.subr.mxu0 %v802
        %824 = vmatpush1.msra.mxu0 %v801
        %825 = vmatprep.subr.mxu0 %v804
        %826 = vmatpush1.msra.mxu0 %v803
        %827 = vmatprep.subr.mxu0 %v806
        %828 = vmatpush1.msra.mxu0 %v805
        %829 = vmatprep.subr.mxu0 %v808
        %830 = vmatpush1.msra.mxu0 %v807
        %831 = vmatprep.subr.mxu0 0.0
        %832 = vmatpush1.msra.mxu0 0.0
        %833 = vmatprep.subr.mxu0 0.0
        %834 = vmatpush1.msra.mxu0 0.0
        %835 = vmatprep.subr.mxu0 0.0
        %836 = vmatpush1.msra.mxu0 0.0
        %837 = vmatprep.subr.mxu0 0.0
        %838 = vmatpush1.msra.mxu0 0.0
        %839 = vmatprep.subr.mxu0 0.0
        %840 = vmatpush1.msra.mxu0 0.0
        %841 = vmatprep.subr.mxu0 0.0
        %842 = vmatpush1.msra.mxu0 0.0
        %843 = vmatprep.subr.mxu0 0.0
        %844 = vmatpush1.msra.mxu0 0.0
        %845 = vmatprep.subr.mxu0 0.0
        %846 = vmatpush1.msra.mxu0 0.0
        %847 = vmatprep.subr.mxu0 0.0
        %848 = vmatpush1.msra.mxu0 0.0
        %849 = vmatprep.subr.mxu0 0.0
        %850 = vmatpush1.msra.mxu0 0.0
        %851 = vmatprep.subr.mxu0 0.0
        %852 = vmatpush1.msra.mxu0 0.0
        %853 = vmatprep.subr.mxu0 0.0
        %854 = vmatpush1.msra.mxu0 0.0
        %855 = vmatprep.subr.mxu0 0.0
        %856 = vmatpush1.msra.mxu0 0.0
        %857 = vmatprep.subr.mxu0 0.0
        %858 = vmatpush1.msra.mxu0 0.0
        %859 = vmatprep.subr.mxu0 0.0
        %860 = vmatpush1.msra.mxu0 0.0
        %861 = vmatprep.subr.mxu0 0.0
        %862 = vmatpush1.msra.mxu0 0.0
        %863 = vmatprep.subr.mxu0 0.0
        %864 = vmatpush1.msra.mxu0 0.0
        %865 = vmatprep.subr.mxu0 0.0
        %866 = vmatpush1.msra.mxu0 0.0
        %867 = vmatprep.subr.mxu0 0.0
        %868 = vmatpush1.msra.mxu0 0.0
        %869 = vmatprep.subr.mxu0 0.0
        %870 = vmatpush1.msra.mxu0 0.0
        %871 = vmatprep.subr.mxu0 0.0
        %872 = vmatpush1.msra.mxu0 0.0
        %873 = vmatprep.subr.mxu0 0.0
        %874 = vmatpush1.msra.mxu0 0.0
        %875 = vmatprep.subr.mxu0 0.0
        %876 = vmatpush1.msra.mxu0 0.0
        %877 = vmatprep.mubr.f32.mxu0 0.0
        %878 = vmatmul.mubr.f32.gmra.mrb[0].mxu0 %v811
        %v879 = vpop.f32.mrb[0].mxu0
        %v880 = vadd.f32 0.0, %v879
        %v881 = vpop.f32.mrb[0].mxu0
        %v882 = vadd.f32 0.0, %v881
        %883 = vdwg.mxu0
        %v884 = vadd.f32 %v880, %v882
        %885 = vadd.xlane.f32.xlu0 %v884
        %v886 = vpop.xlane.xlu0 %885
        %v887 = vmul.f32 %v886, 0.00390625
        %v888 = vsub.f32 %v880, %v887
        %v889 = vsub.f32 %v882, %v887
        %v890 = vmul.f32 %v888, %v888
        %v891 = vmul.f32 %v889, %v889
        %v892 = vadd.f32 %v890, %v891
        %893 = vadd.xlane.f32.xlu0 %v892
        %v894 = vpop.xlane.xlu0 %893
        %v895 = vmul.f32 %v894, 0.00390625
        %v896 = vadd.f32 %v895, 1e-05
        %v897 = vrsqrt.pop %v896
        %v898 = vmul.f32 %v888, %v897
        %v899 = vmul.f32 %v889, %v897
        %vm900 = vcmp.gt.f32.partialorder %v898, 0.0
        %vm901 = vcmp.gt.f32.partialorder %v899, 0.0
        %v902 = vmul.f32 %v898, 0.1
        %v903 = vmul.f32 %v899, 0.1
        %v904 = vsel %vm900, %v898, %v902
        %v905 = vsel %vm901, %v899, %v903
        %906 = vst [vmem:[%s211] sm:$0xff] %v904
        %907 = vst [vmem:[%s211 + $0x8] sm:$0xff] %v905
        %s908 = sand.u32 %s97, 1
        %s909 = scalar_lea.sflag [#allocation7], %s908
        %s910 = sand.u32 %s97, 1
        %s911 = smul.addr %s910, 16
        %s912 = scalar_lea.vmem [#allocation11], %s911
        // Predicated region
        $region45: #{tpu_custom_call.1} parent=31 // pred_check
          %p913 = pneg %p107
        $region46: #{tpu_custom_call.1} parent=31 // pred_check_branch
          %915 = sbr.rel (%p913) target = $region48
        $region47: #{tpu_custom_call.1} parent=31 // pred_region
          %s917 = ssub.s32 256, 256
          %918 = vsyncadd %s909, %s917
          %s919 = smul.addr %s21, 2
          %s920 = smul.addr %s919, 128
          %s921 = scalar_lea.hbm %s3, %s920
          %s923 = sshll.u32 %s912, 4
          %s924 = int_to_ptr.vmem [resolvable:$true] %s923
          %926 = dma.vmem_to_hbm [thread:$0]  %s924, 256, %s921, %s909
        $region48: #{tpu_custom_call.1} parent=31 // pred_fallthru
          _
      $region32: #{tpu_custom_call.1} parent=5 // pred_fallthru
        _
      %p927 = scmp.le.s32.totalorder 2, %s16
      // Predicated region
      $region49: #{tpu_custom_call.1} parent=5 // pred_check
        %p928 = pneg %p927
      $region50: #{tpu_custom_call.1} parent=5 // pred_check_branch
        %930 = sbr.rel (%p928) target = $region52
      $region51: #{tpu_custom_call.1} parent=5 // pred_region
        %s931 = ssub.s32 %s16, 2
        // Predicated region
        $region53: #{tpu_custom_call.1} parent=51 // pred_check
          %p932 = pneg %p113
        $region54: #{tpu_custom_call.1} parent=51 // pred_check_branch
          %934 = sbr.rel (%p932) target = $region56
        $region55: #{tpu_custom_call.1} parent=51 // pred_region
          %s935 = sand.u32 %s98, 1
          %s936 = scalar_lea.sflag [#allocation7], %s935
          %s937 = sand.u32 %s98, 1
          %s938 = smul.addr %s937, 16
          %s939 = scalar_lea.vmem [#allocation11], %s938
          %940 = dma.done %s936, 256
        $region56: #{tpu_custom_call.1} parent=51 // pred_fallthru
          _
      $region52: #{tpu_custom_call.1} parent=5 // pred_fallthru
        _
    $region6: #{tpu_custom_call.1} parent=1 // loop_footer
      %s20 = sadd.s32 1, %s16
    $region7: #{tpu_custom_call.1} parent=1 // loop_footer_branch
      %15 = sbr.rel target = $region3
    $region8: #{tpu_custom_call.1} parent=1 // loop_exit
      _
    %941 = vsyncpa [#allocation6], 1
    %s942 = scalar_lea.sflag [#allocation6], 1
    %943 = vsyncpa %s942, 1
    %944 = vsyncpa [#allocation9], 1
    %945 = vsyncpa [#allocation7], 1
    %s946 = scalar_lea.sflag [#allocation7], 1
    %947 = vsyncpa %s946, 1

</llo_original>
